<compile_context>
chip_gen: v5e
topology: v5e:2x2
jax: 0.10.0
libtpu: 0.0.40
codegen_flags: <defaults>
</compile_context>

<pallas_src>
import functools

import jax
import jax.numpy as jnp
from jax import lax
from jax.experimental import pallas as pl
from jax.experimental.pallas import tpu as pltpu

MOMENTUM = 0.1
INIT_NORM_FACTOR = 1.0

_LANE = 128             # vreg lane width
_SUBLANE = 8            # f32 sublane granule
_MAX_LANE_BLOCK = 512   # lane-dense target per block
_MAX_SUB_BLOCK = 1024   # mc_samples rows per block (1024 x 512 f32 = 2 MiB / buffer)


def _round_up(x, m):
    return (x + m - 1) // m * m


def _mc_pose_loss_kernel(logw_ref, cost_ref, out_ref, m_sc, l_sc, *,
                         num_obj, lane_block):
    i = pl.program_id(0)   # num_obj (lane) block       -- "parallel"
    k = pl.program_id(1)   # mc_samples (sublane) block -- reduction ("arbitrary", last)

    @pl.when(k == 0)
    def _init():
        m_sc[...] = jnp.full_like(m_sc, -jnp.inf)
        l_sc[...] = jnp.zeros_like(l_sc)

    # --- streaming (online) logsumexp over mc_samples ---
    # Cast to f32 in-kernel (inputs arrive in native dtype; v5e VPU has no bf16 ALUs).
    x = logw_ref[...].astype(jnp.float32)                 # (sub_block, lane_block)
    bm = jnp.max(x, axis=0, keepdims=True)                # XLU cross-sublane reduce
    m_new = jnp.maximum(m_sc[...], bm)
    # Guard: if every logweight seen so far is -inf, keep exp() arguments finite so
    # the finalize step yields -inf (matches logsumexp semantics), not NaN.
    m_safe = jnp.where(jnp.isfinite(m_new), m_new, 0.0)
    alpha = jnp.exp(m_sc[...] - m_safe)                   # EUP
    p = jnp.exp(x - m_safe)                               # EUP
    l_sc[...] = alpha * l_sc[...] + jnp.sum(p, axis=0, keepdims=True)
    m_sc[...] = m_new

    @pl.when(k == pl.num_programs(1) - 1)
    def _finalize():
        lse = m_sc[...] + jnp.log(l_sc[...])                          # (1, lane_block)
        loss_pose = cost_ref[...].astype(jnp.float32) + lse
        loss_pose = jnp.where(jnp.isnan(loss_pose), 0.0, loss_pose)   # nan -> 0
        # zero out padded object lanes so the host-side sum only sees real objects
        lane = i * lane_block + lax.broadcasted_iota(jnp.int32, (1, lane_block), 1)
        out_ref[...] = jnp.where(lane < num_obj, loss_pose, 0.0)


def monte_carlo_pose_loss(pose_sample_logweights, cost_target, norm_factor,
                          norm_factor_buffer, momentum=MOMENTUM):
    """Functional MonteCarloPoseLoss (training mode).

    Args:
        pose_sample_logweights: (mc_samples, num_obj)
        cost_target:            (num_obj,)
        norm_factor:            scalar
        norm_factor_buffer:     scalar (the module's registered buffer)

    Returns:
        (loss scalar, updated norm_factor buffer scalar)
    """
    mc_samples, num_obj = pose_sample_logweights.shape

    lane_block = min(_MAX_LANE_BLOCK, _round_up(num_obj, _LANE))
    sub_block = min(_MAX_SUB_BLOCK, _round_up(mc_samples, _SUBLANE))
    nobj_pad = _round_up(num_obj, lane_block)
    mc_pad = _round_up(mc_samples, sub_block)

    # Pad in the NATIVE dtype (no host up-cast). -inf is the logsumexp identity, so
    # padded mc rows are neutral; padded object lanes are masked inside the kernel.
    logw = pose_sample_logweights
    if (mc_pad, nobj_pad) != (mc_samples, num_obj):
        logw = jnp.pad(logw,
                       ((0, mc_pad - mc_samples), (0, nobj_pad - num_obj)),
                       constant_values=-jnp.inf)
    cost2d = cost_target.reshape(1, num_obj)
    if nobj_pad != num_obj:
        cost2d = jnp.pad(cost2d, ((0, 0), (0, nobj_pad - num_obj)))

    grid = (nobj_pad // lane_block, mc_pad // sub_block)
    kernel = functools.partial(_mc_pose_loss_kernel,
                               num_obj=num_obj, lane_block=lane_block)

    per_obj_loss = pl.pallas_call(
        kernel,
        out_shape=jax.ShapeDtypeStruct((1, nobj_pad), jnp.float32),
        grid_spec=pltpu.PrefetchScalarGridSpec(
            num_scalar_prefetch=0,
            grid=grid,
            in_specs=[
                pl.BlockSpec((sub_block, lane_block), lambda i, k: (k, i)),  # logweights
                pl.BlockSpec((1, lane_block), lambda i, k: (0, i)),          # cost_target
            ],
            out_specs=pl.BlockSpec((1, lane_block), lambda i, k: (0, i)),
            scratch_shapes=[
                pltpu.VMEM((1, lane_block), jnp.float32),   # running max
                pltpu.VMEM((1, lane_block), jnp.float32),   # running sum-exp
            ],
        ),
        compiler_params=pltpu.CompilerParams(
            dimension_semantics=("parallel", "arbitrary"),
            vmem_limit_bytes=32 * 1024 * 1024,
        ),
    )(logw, cost2d)

    # Scalar epilogue in plain XLA (3 ops): EMA buffer update + mean + normalize.
    nf = jnp.asarray(norm_factor, jnp.float32)
    buf = jnp.asarray(norm_factor_buffer, jnp.float32)
    new_buf = (1.0 - momentum) * buf + momentum * nf
    loss = jnp.sum(per_obj_loss) / (jnp.float32(num_obj) * new_buf)
    return loss, new_buf


def _reference(pose_sample_logweights, cost_target, norm_factor,
               norm_factor_buffer, momentum=MOMENTUM):
    new_buf = (1.0 - momentum) * norm_factor_buffer + momentum * norm_factor
    loss_pred = jax.scipy.special.logsumexp(
        pose_sample_logweights.astype(jnp.float32), axis=0)
    loss_pose = cost_target.astype(jnp.float32) + loss_pred
    loss_pose = jnp.where(jnp.isnan(loss_pose), 0.0, loss_pose)
    return jnp.mean(loss_pose) / new_buf, new_buf


if __name__ == "__main__":
    key = jax.random.PRNGKey(0)
    k1, k2, k3, k4, k5 = jax.random.split(key, 5)

    # --- small test (shapes implied by the module: mc_samples=16, num_obj=8) ---
    mc_samples, num_obj = 16, 8
    pose_sample_logweights = jax.random.normal(k1, (mc_samples, num_obj), jnp.float32)
    cost_target = jax.random.normal(k2, (num_obj,), jnp.float32) * 2.0
    # inject one NaN to exercise the nan -> 0 path (as in the PyTorch module)
    cost_target = cost_target.at[3].set(jnp.nan)
    norm_factor = jnp.abs(jax.random.normal(k3, (), jnp.float32)) + 1.0
    # deterministic "buffer" init, matching register_buffer('norm_factor', 1.0)
    norm_factor_buffer = jnp.float32(INIT_NORM_FACTOR)

    loss, new_buf = monte_carlo_pose_loss(
        pose_sample_logweights, cost_target, norm_factor, norm_factor_buffer)
    jax.block_until_ready((loss, new_buf))
    ref_loss, ref_buf = _reference(
        pose_sample_logweights, cost_target, norm_factor, norm_factor_buffer)
    assert jnp.allclose(loss, ref_loss, rtol=1e-5, atol=1e-5), (loss, ref_loss)
    assert jnp.allclose(new_buf, ref_buf, rtol=1e-6, atol=1e-6), (new_buf, ref_buf)

    # --- larger test: exercises multi-block grid, -inf mc padding and lane masking ---
    mc2, nobj2 = 2056, 640   # 3 mc blocks x 2 lane blocks after padding
    logw2 = jax.random.normal(k4, (mc2, nobj2), jnp.float32)
    cost2 = jax.random.normal(k5, (nobj2,), jnp.float32)
    loss2, buf2 = monte_carlo_pose_loss(logw2, cost2, norm_factor, norm_factor_buffer)
    jax.block_until_ready((loss2, buf2))
    ref_loss2, ref_buf2 = _reference(logw2, cost2, norm_factor, norm_factor_buffer)
    assert jnp.allclose(loss2, ref_loss2, rtol=1e-5, atol=1e-5), (loss2, ref_loss2)
    assert jnp.allclose(buf2, ref_buf2, rtol=1e-6, atol=1e-6), (buf2, ref_buf2)

    print("KERNEL_OK")
</pallas_src>

<mosaic_0001>
module attributes {stable_mosaic.version = 11 : i64} {
  func.func @_mc_pose_loss_kernel(%arg0: i32, %arg1: i32, %arg2: memref<16x128xf32, #tpu.memory_space<vmem>>, %arg3: memref<1x128xf32, #tpu.memory_space<vmem>>, %arg4: memref<1x128xf32, #tpu.memory_space<vmem>>, %arg5: memref<1x128xf32, #tpu.memory_space<vmem>>, %arg6: memref<1x128xf32, #tpu.memory_space<vmem>>) attributes {dimension_semantics = [#tpu.dimension_semantics<parallel>, #tpu.dimension_semantics<arbitrary>], iteration_bounds = array<i64: 1, 1>, scalar_prefetch = 0 : i64, scratch_operands = 2 : i64, tpu.core_type = #tpu.core_type<tc>, window_params = [{transform_indices = @transform_0, window_bounds = array<i64: 16, 128>}, {transform_indices = @transform_1, window_bounds = array<i64: 1, 128>}, {transform_indices = @transform_2, window_bounds = array<i64: 1, 128>}]} {
    %c0_i32 = arith.constant 0 : i32
    %0 = arith.cmpi eq, %arg1, %c0_i32 : i32
    %1 = arith.extui %0 : i1 to i32
    %c0_i32_0 = arith.constant 0 : i32
    %2 = arith.cmpi ne, %1, %c0_i32_0 : i32
    scf.if %2 {
      %cst_17 = arith.constant 0xFF800000 : f32
      %28 = vector.broadcast %cst_17 : f32 to vector<1x128xf32>
      %c0_18 = arith.constant 0 : index
      %c0_19 = arith.constant 0 : index
      %29 = vector.load %arg5[%c0_18, %c0_19] : memref<1x128xf32, #tpu.memory_space<vmem>>, vector<1x128xf32>
      tpu.vector_store %arg5[%c0_18, %c0_19], %28 {strides = array<i32>} : memref<1x128xf32, #tpu.memory_space<vmem>>, vector<1x128xf32>,
      %cst_20 = arith.constant 0.000000e+00 : f32
      %30 = vector.broadcast %cst_20 : f32 to vector<1x128xf32>
      %c0_21 = arith.constant 0 : index
      %c0_22 = arith.constant 0 : index
      %31 = vector.load %arg6[%c0_21, %c0_22] : memref<1x128xf32, #tpu.memory_space<vmem>>, vector<1x128xf32>
      tpu.vector_store %arg6[%c0_21, %c0_22], %30 {strides = array<i32>} : memref<1x128xf32, #tpu.memory_space<vmem>>, vector<1x128xf32>,
    } else {
    }
    %c0 = arith.constant 0 : index
    %c0_1 = arith.constant 0 : index
    %3 = vector.load %arg2[%c0, %c0_1] : memref<16x128xf32, #tpu.memory_space<vmem>>, vector<16x128xf32>
    %cst = arith.constant dense<0xFF800000> : vector<128xf32>
    %4 = vector.multi_reduction <maximumf>, %3, %cst [0] : vector<16x128xf32> to vector<128xf32>
    %5 = vector.shape_cast %4 : vector<128xf32> to vector<1x128xf32>
    %c0_2 = arith.constant 0 : index
    %c0_3 = arith.constant 0 : index
    %6 = vector.load %arg5[%c0_2, %c0_3] : memref<1x128xf32, #tpu.memory_space<vmem>>, vector<1x128xf32>
    %7 = arith.maximumf %6, %5 : vector<1x128xf32>
    %8 = tpu.weird %7 : vector<1x128xf32> -> vector<1x128xi1>
    %cst_4 = arith.constant dense<true> : vector<1x128xi1>
    %9 = arith.xori %8, %cst_4 : vector<1x128xi1>
    %cst_5 = arith.constant 0.000000e+00 : f32
    %10 = vector.broadcast %cst_5 : f32 to vector<1x128xf32>
    %11 = arith.select %9, %7, %10 : vector<1x128xi1>, vector<1x128xf32>
    %c0_6 = arith.constant 0 : index
    %c0_7 = arith.constant 0 : index
    %12 = vector.load %arg5[%c0_6, %c0_7] : memref<1x128xf32, #tpu.memory_space<vmem>>, vector<1x128xf32>
    %13 = arith.subf %12, %11 : vector<1x128xf32>
    %14 = math.exp %13 : vector<1x128xf32>
    %15 = vector.broadcast %11 : vector<1x128xf32> to vector<16x128xf32>
    %16 = arith.subf %3, %15 : vector<16x128xf32>
    %17 = math.exp %16 : vector<16x128xf32>
    %c0_8 = arith.constant 0 : index
    %c0_9 = arith.constant 0 : index
    %18 = vector.load %arg6[%c0_8, %c0_9] : memref<1x128xf32, #tpu.memory_space<vmem>>, vector<1x128xf32>
    %19 = arith.mulf %14, %18 : vector<1x128xf32>
    %cst_10 = arith.constant dense<0.000000e+00> : vector<128xf32>
    %20 = vector.multi_reduction <add>, %17, %cst_10 [0] : vector<16x128xf32> to vector<128xf32>
    %21 = vector.shape_cast %20 : vector<128xf32> to vector<1x128xf32>
    %22 = arith.addf %19, %21 : vector<1x128xf32>
    %c0_11 = arith.constant 0 : index
    %c0_12 = arith.constant 0 : index
    %23 = vector.load %arg6[%c0_11, %c0_12] : memref<1x128xf32, #tpu.memory_space<vmem>>, vector<1x128xf32>
    tpu.vector_store %arg6[%c0_11, %c0_12], %22 {strides = array<i32>} : memref<1x128xf32, #tpu.memory_space<vmem>>, vector<1x128xf32>,
    %c0_13 = arith.constant 0 : index
    %c0_14 = arith.constant 0 : index
    %24 = vector.load %arg5[%c0_13, %c0_14] : memref<1x128xf32, #tpu.memory_space<vmem>>, vector<1x128xf32>
    tpu.vector_store %arg5[%c0_13, %c0_14], %7 {strides = array<i32>} : memref<1x128xf32, #tpu.memory_space<vmem>>, vector<1x128xf32>,
    %c0_i32_15 = arith.constant 0 : i32
    %25 = arith.cmpi eq, %arg1, %c0_i32_15 : i32
    %26 = arith.extui %25 : i1 to i32
    %c0_i32_16 = arith.constant 0 : i32
    %27 = arith.cmpi ne, %26, %c0_i32_16 : i32
    scf.if %27 {
      %c0_17 = arith.constant 0 : index
      %c0_18 = arith.constant 0 : index
      %28 = vector.load %arg5[%c0_17, %c0_18] : memref<1x128xf32, #tpu.memory_space<vmem>>, vector<1x128xf32>
      %c0_19 = arith.constant 0 : index
      %c0_20 = arith.constant 0 : index
      %29 = vector.load %arg6[%c0_19, %c0_20] : memref<1x128xf32, #tpu.memory_space<vmem>>, vector<1x128xf32>
      %30 = math.log %29 : vector<1x128xf32>
      %31 = arith.addf %28, %30 : vector<1x128xf32>
      %c0_21 = arith.constant 0 : index
      %c0_22 = arith.constant 0 : index
      %32 = vector.load %arg3[%c0_21, %c0_22] : memref<1x128xf32, #tpu.memory_space<vmem>>, vector<1x128xf32>
      %33 = arith.addf %32, %31 : vector<1x128xf32>
      %34 = arith.cmpf one, %33, %33 : vector<1x128xf32>
      %cst_23 = arith.constant 0.000000e+00 : f32
      %35 = vector.broadcast %cst_23 : f32 to vector<1x128xf32>
      %36 = arith.select %34, %35, %33 : vector<1x128xi1>, vector<1x128xf32>
      %c128_i32 = arith.constant 128 : i32
      %37 = arith.muli %arg0, %c128_i32 : i32
      %38 = tpu.iota {dimensions = array<i32: 1>} : vector<1x128xi32>
      %39 = vector.broadcast %37 : i32 to vector<1x128xi32>
      %40 = arith.addi %39, %38 : vector<1x128xi32>
      %c8_i32 = arith.constant 8 : i32
      %41 = vector.broadcast %c8_i32 : i32 to vector<1x128xi32>
      %42 = arith.cmpi slt, %40, %41 : vector<1x128xi32>
      %cst_24 = arith.constant 0.000000e+00 : f32
      %43 = vector.broadcast %cst_24 : f32 to vector<1x128xf32>
      %44 = arith.select %42, %36, %43 : vector<1x128xi1>, vector<1x128xf32>
      %c0_25 = arith.constant 0 : index
      %c0_26 = arith.constant 0 : index
      %45 = vector.load %arg4[%c0_25, %c0_26] : memref<1x128xf32, #tpu.memory_space<vmem>>, vector<1x128xf32>
      tpu.vector_store %arg4[%c0_25, %c0_26], %44 {strides = array<i32>} : memref<1x128xf32, #tpu.memory_space<vmem>>, vector<1x128xf32>,
    } else {
    }
    return
  }
  func.func @transform_0(%arg0: i32, %arg1: i32) -> (i32, i32) {
    %c0_i32 = arith.constant 0 : i32
    return %arg1, %arg0 : i32, i32
  }
  func.func @transform_1(%arg0: i32, %arg1: i32) -> (i32, i32) {
    %c0_i32 = arith.constant 0 : i32
    %c0_i32_0 = arith.constant 0 : i32
    return %c0_i32, %arg0 : i32, i32
  }
  func.func @transform_2(%arg0: i32, %arg1: i32) -> (i32, i32) {
    %c0_i32 = arith.constant 0 : i32
    %c0_i32_0 = arith.constant 0 : i32
    return %c0_i32, %arg0 : i32, i32
  }
}

</mosaic_0001>

<llo_original>
// kernel: tpu_custom_call.1
$region0: #{tpu_custom_call.1}
  #allocation0 [shape = 'u32[]', space=smem, size = 0x4, offset = 0x4, fixed_abs, tag = 'smem constant byte address 0x4 - core index']
  #allocation1 [shape = 'u32[72,128]{1,0:T(1,128)}', space=vmem, size = 0x9000, scoped, tag = 'internal scratch']
  #allocation2 [shape = 'f32[1,128]{1,0:T(1,128)}', space=vmem, size = 0x200, scoped, tag = 'scratch operand']
  #allocation3 [shape = 'f32[1,128]{1,0:T(1,128)}', space=vmem, size = 0x200, scoped, tag = 'scratch operand']
  %s0 = inlined_call_operand.hbm [shape: f32[16,128], index: 0, kind: input, shape index: {}]
  %s1 = inlined_call_operand.hbm [shape: f32[1,128], index: 1, kind: input, shape index: {}]
  %s2 = inlined_call_operand.hbm [shape: f32[1,128], index: 2, kind: output, shape index: {}]
  %s3 = sld [smem:[#allocation0]]
  $region34: #{tpu_custom_call.1} parent=0
    _
  %s5 = ssub.s32 1, %s3
  %s6 = scalar_select 0, %s5, %s3
  $region1: #{tpu_custom_call.1} parent=0
    #allocation4 [shape = 'u8[8192]{0}', space=vmem, size = 0x2000, scoped, tag = 'input window, operand 0, single buffered']
    #allocation5 [shape = 's32[1]{0}', space=sflag, size = 0x4, scoped, tag = 'scoped memory for tpu_custom_call.1']
    #allocation6 [shape = 's32[1]{0}', space=sflag, size = 0x4, scoped, tag = 'scoped memory for tpu_custom_call.1']
    #allocation7 [shape = 'u8[512]{0}', space=vmem, size = 0x400, scoped, tag = 'input window, operand 1, single buffered']
    #allocation8 [shape = 's32[1]{0}', space=sflag, size = 0x4, scoped, tag = 'scoped memory for tpu_custom_call.1']
    #allocation9 [shape = 'u8[512]{0}', space=vmem, size = 0x400, scoped, tag = 'output window, operand 0, single buffered']
    %7 = vsyncpa [#allocation5], 0
    %8 = vsyncpa [#allocation8], 0
    %9 = vsyncpa [#allocation6], 0
    // Predicated region
    $region2: #{tpu_custom_call.1} parent=1 // pred_check
      _
    $region3: #{tpu_custom_call.1} parent=1 // pred_check_branch
      %11 = sbr.rel (0) target = $region5
    $region4: #{tpu_custom_call.1} parent=1 // pred_region
      %13 = vsyncadd [#allocation5], 0
      %s14 = sshll.u32 %s0, 4
      %s15 = int_to_ptr.hbm [resolvable:$true] %s14
      %s16 = sshll.u32 [#allocation4], 4
      %s17 = int_to_ptr.vmem [resolvable:$true] %s16
      %22 = dma.hbm_to_vmem [thread:$0]  %s15, 256, %s17, [#allocation5], 128, 128, 8
    $region5: #{tpu_custom_call.1} parent=1 // pred_fallthru
      _
    // Predicated region
    $region6: #{tpu_custom_call.1} parent=1 // pred_check
      _
    $region7: #{tpu_custom_call.1} parent=1 // pred_check_branch
      %24 = sbr.rel (0) target = $region9
    $region8: #{tpu_custom_call.1} parent=1 // pred_region
      %26 = vsyncadd [#allocation8], 0
      %s28 = sshll.u32 %s1, 4
      %s29 = int_to_ptr.hbm [resolvable:$true] %s28
      %s30 = sshll.u32 [#allocation7], 4
      %s31 = int_to_ptr.vmem [resolvable:$true] %s30
      %33 = dma.hbm_to_vmem [thread:$0]  %s29, 16, %s31, [#allocation8]
    $region9: #{tpu_custom_call.1} parent=1 // pred_fallthru
      _
    // Predicated region
    $region10: #{tpu_custom_call.1} parent=1 // pred_check
      _
    $region11: #{tpu_custom_call.1} parent=1 // pred_check_branch
      %35 = sbr.rel (0) target = $region13
    $region12: #{tpu_custom_call.1} parent=1 // pred_region
      %37 = dma.done [#allocation5], 256
    $region13: #{tpu_custom_call.1} parent=1 // pred_fallthru
      _
    // Predicated region
    $region14: #{tpu_custom_call.1} parent=1 // pred_check
      _
    $region15: #{tpu_custom_call.1} parent=1 // pred_check_branch
      %39 = sbr.rel (0) target = $region17
    $region16: #{tpu_custom_call.1} parent=1 // pred_region
      %41 = dma.done [#allocation8], 16
    $region17: #{tpu_custom_call.1} parent=1 // pred_fallthru
      _
    %p42 = scmp.eq.s32.totalorder 0, 0
    // Predicated region
    $region18: #{tpu_custom_call.1} parent=1 // pred_check
      %p43 = pneg %p42
    $region19: #{tpu_custom_call.1} parent=1 // pred_check_branch
      %45 = sbr.rel (%p43) target = $region21
    $region20: #{tpu_custom_call.1} parent=1 // pred_region
      %46 = vst [vmem:[#allocation2] sm:$0x1] -inf
      %47 = vst [vmem:[#allocation3] sm:$0x1] 0.0
    $region21: #{tpu_custom_call.1} parent=1 // pred_fallthru
      _
    %v48 = vld [vmem:[#allocation4] sm:$0xff]
    %v49 = vld [vmem:[#allocation4 + $0x8] sm:$0xff]
    %v50 = vmax.f32 %v48, %v49
    %v51 = vrot.slane %v50, 4
    %v52 = vmax.f32 %v50, %v51
    %v53 = vrot.slane %v52, 2
    %v54 = vmax.f32 %v52, %v53
    %v55 = vrot.slane %v54, 1
    %v56 = vmax.f32 %v54, %v55
    %v57 = vld [vmem:[#allocation2] sm:$0x1]
    %v58 = vmax.f32 %v57, %v56
    %vm59 = vweird.f32 %v58
    %vm60 = vmxor %vm59, 1
    %v61 = vsel %vm60, %v58, 0.0
    %v62 = vsub.f32 %v57, %v61
    %v63 = vmul.f32 %v62, 1.442695
    %v64 = vpow.pop %v63
    %v66 = vperm.slane %v61, 0
    %v68 = vsub.f32 %v48, %v66
    %v69 = vsub.f32 %v49, %v66
    %v70 = vmul.f32 %v68, 1.442695
    %v71 = vpow.pop %v70
    %v72 = vmul.f32 %v69, 1.442695
    %v73 = vpow.pop %v72
    %v74 = vld [vmem:[#allocation3] sm:$0x1]
    %v75 = vmul.f32 %v64, %v74
    %v76 = vadd.f32 %v71, %v73
    %v77 = vrot.slane %v76, 4
    %v78 = vadd.f32 %v76, %v77
    %v79 = vrot.slane %v78, 2
    %v80 = vadd.f32 %v78, %v79
    %v81 = vrot.slane %v80, 1
    %v82 = vadd.f32 %v80, %v81
    %v83 = vadd.f32 %v75, %v82
    %84 = vst [vmem:[#allocation3] sm:$0x1] %v83
    %85 = vst [vmem:[#allocation2] sm:$0x1] %v58
    // Predicated region
    $region22: #{tpu_custom_call.1} parent=1 // pred_check
      %p86 = pneg %p42
    $region23: #{tpu_custom_call.1} parent=1 // pred_check_branch
      %88 = sbr.rel (%p86) target = $region25
    $region24: #{tpu_custom_call.1} parent=1 // pred_region
      %v89 = vld [vmem:[#allocation2] sm:$0x1]
      %v90 = vld [vmem:[#allocation3] sm:$0x1]
      %v91 = vlog2.pop %v90
      %v92 = vmul.f32 %v91, 0.6931472
      %v93 = vadd.f32 %v89, %v92
      %v94 = vld [vmem:[#allocation7] sm:$0x1]
      %v95 = vadd.f32 %v94, %v93
      %vm96 = vcmp.ne.f32.partialorder %v95, %v95
      %v97 = vsel %vm96, 0.0, %v95
      %s98 = smul.u32 0, 128
      %v99 = vlaneseq
      %v100 = vand.u32 %v99, 127
      %v101 = vstv %s98
      %v102 = vadd.s32 %v101, %v100
      %vm103 = vcmp.lt.s32.totalorder %v102, 8
      %v104 = vsel %vm103, %v97, 0.0
      %105 = vst [vmem:[#allocation9] sm:$0x1] %v104
    $region25: #{tpu_custom_call.1} parent=1 // pred_fallthru
      _
    // Predicated region
    $region26: #{tpu_custom_call.1} parent=1 // pred_check
      _
    $region27: #{tpu_custom_call.1} parent=1 // pred_check_branch
      %107 = sbr.rel (0) target = $region29
    $region28: #{tpu_custom_call.1} parent=1 // pred_region
      %109 = vsyncadd [#allocation6], 0
      %s111 = sshll.u32 [#allocation9], 4
      %s112 = int_to_ptr.vmem [resolvable:$true] %s111
      %s113 = sshll.u32 %s2, 4
      %s114 = int_to_ptr.hbm [resolvable:$true] %s113
      %116 = dma.vmem_to_hbm [thread:$0]  %s112, 16, %s114, [#allocation6]
    $region29: #{tpu_custom_call.1} parent=1 // pred_fallthru
      _
    // Predicated region
    $region30: #{tpu_custom_call.1} parent=1 // pred_check
      _
    $region31: #{tpu_custom_call.1} parent=1 // pred_check_branch
      %118 = sbr.rel (0) target = $region33
    $region32: #{tpu_custom_call.1} parent=1 // pred_region
      %120 = dma.done [#allocation6], 16
    $region33: #{tpu_custom_call.1} parent=1 // pred_fallthru
      _
    %121 = vsyncpa [#allocation5], 1
    %122 = vsyncpa [#allocation8], 1
    %123 = vsyncpa [#allocation6], 1

</llo_original>
